<compile_context>
chip_gen: v7x
topology: tpu7x:2x2x1
jax: 0.10.0
libtpu: 0.0.40
codegen_flags: <defaults>
</compile_context>

<pallas_src>
import functools

import jax
import jax.numpy as jnp
from jax import lax
from jax.experimental import pallas as pl
from jax.experimental.pallas import tpu as pltpu


def _round_up(x, m):
    return ((x + m - 1) // m) * m


def _choose_tile_n(n):
    # Keep the (TILE_N, N) f32 hinge slab roughly <= 8 MiB; power of two,
    # between 8 and 256 rows.
    budget_rows = (8 << 20) // max(4 * n, 1)
    tile = 8
    while tile * 2 <= min(256, budget_rows):
        tile *= 2
    return tile


def _batch_loss_kernel(a_ref, pd_ref, p_ref, o_ref, *, margin, tile_n,
                       n_valid, mask_rows):
    # a_ref : (TILE_N, D) tile of anchor rows (native dtype).
    # pd_ref: (TILE_N, D) matching rows of P (positive/diagonal term).
    # p_ref : (N, D) full positive matrix, resident across the grid.
    # o_ref : (1, 1) SMEM per-tile partial sum.
    a = a_ref[...]
    pd = pd_ref[...]
    p = p_ref[...]

    # Pre-scale by 2 in-kernel (exact power-of-two scale, (TILE_N, D) VPU op).
    a2 = a * jnp.asarray(2.0, dtype=a.dtype)

    # sim2[i, j] = 2 * <a_i, p_j>; contract over D directly -> no transpose,
    # both operands consumed by the MXU in natural layout.
    sim2 = lax.dot_general(
        a2, p,
        dimension_numbers=(((1,), (1,)), ((), ())),
        preferred_element_type=jnp.float32)                  # (TILE_N, N) f32

    # c_i = margin - 2 * <a_i, p_i>, computed in f32 on the VPU (overlaps MXU).
    pos2 = jnp.sum(a2.astype(jnp.float32) * pd.astype(jnp.float32),
                   axis=1, keepdims=True)                    # (TILE_N, 1)
    c = margin - pos2

    # Two passes over the (TILE_N, N) slab: broadcast-add, then max.
    hinge = jnp.maximum(sim2 + c, 0.0)                       # (TILE_N, N)
    row_sum = jnp.sum(hinge, axis=1, keepdims=True)          # (TILE_N, 1)

    if mask_rows:  # trace-time flag: only when A rows were zero-padded
        base = pl.program_id(0) * tile_n
        rows = base + lax.broadcasted_iota(jnp.int32, row_sum.shape, 0)
        row_sum = jnp.where(rows < n_valid, row_sum, 0.0)

    o_ref[0, 0] = jnp.sum(row_sum)


def batch_loss(anchor_features, positive_features, labels, margin=0.1,
               tile_n=None):
    # `labels` / `target` are computed in the PyTorch module but never used by
    # the returned loss, so they are not sent to the kernel hot path.
    del labels
    n, d = anchor_features.shape
    assert positive_features.shape == (n, d)

    if tile_n is None:
        tile_n = _choose_tile_n(n)
    tile_n = min(tile_n, _round_up(n, 8))    # multiple of 8 by construction
    n_pad = _round_up(n, tile_n)
    num_tiles = n_pad // tile_n
    mask_rows = n_pad != n

    a_t = anchor_features
    p_t = positive_features
    if mask_rows:
        pad = ((0, n_pad - n), (0, 0))
        a_t = jnp.pad(a_t, pad)              # streamed A row tiles
        p_t = jnp.pad(p_t, pad)              # streamed P rows for the diagonal

    kernel = functools.partial(
        _batch_loss_kernel, margin=float(margin), tile_n=tile_n,
        n_valid=n, mask_rows=mask_rows)

    itemsize = jnp.dtype(anchor_features.dtype).itemsize
    slab = 4 * tile_n * n                    # one (TILE_N, N) f32 slab
    vmem_est = (3 * slab + 2 * n * d * itemsize
                + 8 * tile_n * d * itemsize + (2 << 20))
    vmem_limit = int(min(max(vmem_est, 8 << 20), 64 << 20))

    partials = pl.pallas_call(
        kernel,
        out_shape=jax.ShapeDtypeStruct((num_tiles, 1), jnp.float32),
        grid=(num_tiles,),
        in_specs=[
            pl.BlockSpec((tile_n, d), lambda i: (i, 0)),   # A tile (streamed)
            pl.BlockSpec((tile_n, d), lambda i: (i, 0)),   # P rows for diag
            pl.BlockSpec((n, d), lambda i: (0, 0)),        # full P, resident
        ],
        out_specs=pl.BlockSpec((1, 1), lambda i: (i, 0),
                               memory_space=pltpu.MemorySpace.SMEM),
        compiler_params=pltpu.CompilerParams(
            dimension_semantics=("parallel",),
            vmem_limit_bytes=vmem_limit),
    )(a_t, p_t, positive_features)

    # Tiny cross-tile reduce + mean (divide folded into a constant multiply).
    return jnp.sum(partials) * (1.0 / float(n))


def _reference(anchor, positive, margin=0.1):
    sqdist = 2.0 - 2.0 * anchor @ positive.T
    pos_dist = jnp.diagonal(sqdist)
    diff = pos_dist[:, None] - sqdist
    loss = jnp.sum(jnp.maximum(diff + margin, 0.0), axis=1)
    return loss.mean()


if __name__ == "__main__":
    key = jax.random.PRNGKey(0)
    k1, k2, k3 = jax.random.split(key, 3)

    # Small shapes consistent with the module: N anchor/positive features of
    # dim D, L2-normalized (the 2 - 2*cos-sim distance implies unit features).
    N, D = 8, 32
    anchor = jax.random.normal(k1, (N, D), dtype=jnp.float32)
    anchor = anchor / jnp.linalg.norm(anchor, axis=1, keepdims=True)
    positive = jax.random.normal(k2, (N, D), dtype=jnp.float32)
    positive = positive / jnp.linalg.norm(positive, axis=1, keepdims=True)
    labels = jax.random.randint(k3, (N,), 0, 4, dtype=jnp.int32)

    loss = batch_loss(anchor, positive, labels, margin=0.1)
    jax.block_until_ready(loss)
    ref = _reference(anchor, positive, margin=0.1)
    assert jnp.allclose(loss, ref, atol=2e-5, rtol=2e-5), (loss, ref)

    # Exercise the multi-tile + zero-padded/masked tail path.
    N2 = 20
    k4, k5 = jax.random.split(k3)
    a2 = jax.random.normal(k4, (N2, D), dtype=jnp.float32)
    a2 = a2 / jnp.linalg.norm(a2, axis=1, keepdims=True)
    p2 = jax.random.normal(k5, (N2, D), dtype=jnp.float32)
    p2 = p2 / jnp.linalg.norm(p2, axis=1, keepdims=True)
    loss2 = batch_loss(a2, p2, None, margin=0.1, tile_n=8)
    jax.block_until_ready(loss2)
    ref2 = _reference(a2, p2, margin=0.1)
    assert jnp.allclose(loss2, ref2, atol=2e-5, rtol=2e-5), (loss2, ref2)

    print("KERNEL_OK")
</pallas_src>

<mosaic_0001>
module attributes {stable_mosaic.version = 11 : i64} {
  func.func @_batch_loss_kernel(%arg0: i32, %arg1: memref<8x32xf32, #tpu.memory_space<vmem>>, %arg2: memref<8x32xf32, #tpu.memory_space<vmem>>, %arg3: memref<8x32xf32, #tpu.memory_space<vmem>>, %arg4: memref<1x1xf32, #tpu.memory_space<smem>>) attributes {dimension_semantics = [#tpu.dimension_semantics<parallel>], iteration_bounds = array<i64: 1>, scalar_prefetch = 0 : i64, scratch_operands = 0 : i64, tpu.core_type = #tpu.core_type<tc>, window_params = [{transform_indices = @transform_0, window_bounds = array<i64: 8, 32>}, {transform_indices = @transform_1, window_bounds = array<i64: 8, 32>}, {pipeline_mode = #tpu.pipeline_mode<synchronous>, transform_indices = @transform_2, window_bounds = array<i64: 8, 32>}, {transform_indices = @transform_3, window_bounds = array<i64: 1, 1>}]} {
    %c0 = arith.constant 0 : index
    %c0_0 = arith.constant 0 : index
    %0 = vector.load %arg1[%c0, %c0_0] : memref<8x32xf32, #tpu.memory_space<vmem>>, vector<8x32xf32>
    %c0_1 = arith.constant 0 : index
    %c0_2 = arith.constant 0 : index
    %1 = vector.load %arg2[%c0_1, %c0_2] : memref<8x32xf32, #tpu.memory_space<vmem>>, vector<8x32xf32>
    %c0_3 = arith.constant 0 : index
    %c0_4 = arith.constant 0 : index
    %2 = vector.load %arg3[%c0_3, %c0_4] : memref<8x32xf32, #tpu.memory_space<vmem>>, vector<8x32xf32>
    %cst = arith.constant 2.000000e+00 : f32
    %3 = vector.broadcast %cst : f32 to vector<8x32xf32>
    %4 = arith.mulf %0, %3 : vector<8x32xf32>
    %cst_5 = arith.constant dense<0.000000e+00> : vector<8x8xf32>
    %5 = tpu.matmul %4, %2, %cst_5 {dimension_numbers = #tpu.dot_dimension_numbers<[1], [1], [0], [0], [0, 0, 1, 0], [], []>} : vector<8x32xf32>, vector<8x32xf32>, vector<8x8xf32> -> vector<8x8xf32>
    %6 = arith.mulf %4, %1 : vector<8x32xf32>
    %cst_6 = arith.constant dense<0.000000e+00> : vector<8xf32>
    %7 = vector.multi_reduction <add>, %6, %cst_6 [1] : vector<8x32xf32> to vector<8xf32>
    %8 = vector.shape_cast %7 : vector<8xf32> to vector<8x1xf32>
    %cst_7 = arith.constant 1.000000e-01 : f32
    %9 = vector.broadcast %cst_7 : f32 to vector<8x1xf32>
    %10 = arith.subf %9, %8 : vector<8x1xf32>
    %11 = vector.broadcast %10 : vector<8x1xf32> to vector<8x8xf32>
    %12 = arith.addf %5, %11 : vector<8x8xf32>
    %cst_8 = arith.constant 0.000000e+00 : f32
    %13 = vector.broadcast %cst_8 : f32 to vector<8x8xf32>
    %14 = arith.maximumf %12, %13 : vector<8x8xf32>
    %cst_9 = arith.constant dense<0.000000e+00> : vector<8xf32>
    %15 = vector.multi_reduction <add>, %14, %cst_9 [1] : vector<8x8xf32> to vector<8xf32>
    %16 = vector.shape_cast %15 : vector<8xf32> to vector<8x1xf32>
    %17 = vector.shape_cast %16 : vector<8x1xf32> to vector<1x8x1xf32>
    %cst_10 = arith.constant dense<0.000000e+00> : vector<1xf32>
    %18 = vector.multi_reduction <add>, %17, %cst_10 [1, 2] : vector<1x8x1xf32> to vector<1xf32>
    %19 = vector.shape_cast %18 : vector<1xf32> to vector<1x1x1xf32>
    %20 = vector.extract %19[0, 0, 0] : f32 from vector<1x1x1xf32>
    %c0_11 = arith.constant 0 : index
    %c0_12 = arith.constant 0 : index
    %21 = memref.load %arg4[%c0_11, %c0_12] : memref<1x1xf32, #tpu.memory_space<smem>>
    memref.store %20, %arg4[%c0_11, %c0_12] : memref<1x1xf32, #tpu.memory_space<smem>>
    return
  }
  func.func @transform_0(%arg0: i32) -> (i32, i32) {
    %c0_i32 = arith.constant 0 : i32
    %c0_i32_0 = arith.constant 0 : i32
    return %arg0, %c0_i32 : i32, i32
  }
  func.func @transform_1(%arg0: i32) -> (i32, i32) {
    %c0_i32 = arith.constant 0 : i32
    %c0_i32_0 = arith.constant 0 : i32
    return %arg0, %c0_i32 : i32, i32
  }
  func.func @transform_2(%arg0: i32) -> (i32, i32) {
    %c0_i32 = arith.constant 0 : i32
    %c0_i32_0 = arith.constant 0 : i32
    %c0_i32_1 = arith.constant 0 : i32
    return %c0_i32, %c0_i32_0 : i32, i32
  }
  func.func @transform_3(%arg0: i32) -> (i32, i32) {
    %c0_i32 = arith.constant 0 : i32
    %c0_i32_0 = arith.constant 0 : i32
    return %arg0, %c0_i32 : i32, i32
  }
}

</mosaic_0001>

<llo_original>
// kernel: tpu_custom_call.1
$region0: #{tpu_custom_call.1}
  #allocation0 [shape = 'u32[]', space=smem, size = 0x4, offset = 0x4, fixed_abs, tag = 'smem constant byte address 0x4 - core index']
  #allocation1 [shape = 'u32[144,128]{1,0:T(1,128)}', space=vmem, size = 0x12000, scoped, tag = 'internal scratch']
  %s0 = inlined_call_operand.hbm [shape: f32[8,32], index: 0, kind: input, shape index: {}]
  %s1 = inlined_call_operand.hbm [shape: f32[8,32], index: 1, kind: input, shape index: {}]
  %s2 = inlined_call_operand.hbm [shape: f32[8,32], index: 2, kind: input, shape index: {}]
  %s3 = inlined_call_operand.hbm [shape: f32[1,1], index: 3, kind: output, shape index: {}]
  %s4 = sld [smem:[#allocation0]]
  $region34: #{tpu_custom_call.1} parent=0
    _
  %s6 = ssub.s32 1, %s4
  %s7 = scalar_select 0, %s6, %s4
  $region1: #{tpu_custom_call.1} parent=0
    #allocation2 [shape = 'u8[4096]{0}', space=vmem, size = 0x1000, scoped, tag = 'input window, operand 0, single buffered']
    #allocation3 [shape = 's32[1]{0}', space=sflag, size = 0x4, scoped, tag = 'scoped memory for tpu_custom_call.1']
    #allocation4 [shape = 's32[1]{0}', space=sflag, size = 0x4, scoped, tag = 'scoped memory for tpu_custom_call.1']
    #allocation5 [shape = 'u8[4096]{0}', space=vmem, size = 0x1000, scoped, tag = 'input window, operand 1, single buffered']
    #allocation6 [shape = 's32[1]{0}', space=sflag, size = 0x4, scoped, tag = 'scoped memory for tpu_custom_call.1']
    #allocation7 [shape = 'u8[4096]{0}', space=vmem, size = 0x1000, scoped, tag = 'input window, operand 2, single buffered']
    #allocation8 [shape = 'u8[512]{0}', space=smem, size = 0x200, scoped, tag = 'output window, operand 0, single buffered']
    %8 = vsyncpa [#allocation3], 0
    %9 = vsyncpa [#allocation6], 0
    %10 = vsyncpa [#allocation4], 0
    // Predicated region
    $region2: #{tpu_custom_call.1} parent=1 // pred_check
      _
    $region3: #{tpu_custom_call.1} parent=1 // pred_check_branch
      %12 = sbr.rel (0) target = $region5
    $region4: #{tpu_custom_call.1} parent=1 // pred_region
      %s14 = ssub.s32 128, 128
      %15 = vsyncadd [#allocation3], %s14
      %s17 = sshll.u32 [#allocation2], 4
      %s18 = int_to_ptr.vmem [resolvable:$true] %s17
      %20 = dma.hbm_to_vmem [thread:$0]  %s0, 128, %s18, [#allocation3]
    $region5: #{tpu_custom_call.1} parent=1 // pred_fallthru
      _
    // Predicated region
    $region6: #{tpu_custom_call.1} parent=1 // pred_check
      _
    $region7: #{tpu_custom_call.1} parent=1 // pred_check_branch
      %22 = sbr.rel (0) target = $region9
    $region8: #{tpu_custom_call.1} parent=1 // pred_region
      %s24 = ssub.s32 128, 128
      %25 = vsyncadd [#allocation6], %s24
      %s27 = sshll.u32 [#allocation5], 4
      %s28 = int_to_ptr.vmem [resolvable:$true] %s27
      %30 = dma.hbm_to_vmem [thread:$0]  %s1, 128, %s28, [#allocation6]
    $region9: #{tpu_custom_call.1} parent=1 // pred_fallthru
      _
    // Predicated region
    $region10: #{tpu_custom_call.1} parent=1 // pred_check
      _
    $region11: #{tpu_custom_call.1} parent=1 // pred_check_branch
      %32 = sbr.rel (0) target = $region13
    $region12: #{tpu_custom_call.1} parent=1 // pred_region
      %s34 = ssub.s32 128, 128
      %35 = vsyncadd [#allocation6], %s34
      %s37 = sshll.u32 [#allocation7], 4
      %s38 = int_to_ptr.vmem [resolvable:$true] %s37
      %40 = dma.hbm_to_vmem [thread:$0]  %s2, 128, %s38, [#allocation6]
    $region13: #{tpu_custom_call.1} parent=1 // pred_fallthru
      _
    // Predicated region
    $region14: #{tpu_custom_call.1} parent=1 // pred_check
      _
    $region15: #{tpu_custom_call.1} parent=1 // pred_check_branch
      %42 = sbr.rel (0) target = $region17
    $region16: #{tpu_custom_call.1} parent=1 // pred_region
      %43 = dma.done [#allocation3], 128
    $region17: #{tpu_custom_call.1} parent=1 // pred_fallthru
      _
    // Predicated region
    $region18: #{tpu_custom_call.1} parent=1 // pred_check
      _
    $region19: #{tpu_custom_call.1} parent=1 // pred_check_branch
      %45 = sbr.rel (0) target = $region21
    $region20: #{tpu_custom_call.1} parent=1 // pred_region
      %46 = dma.done [#allocation6], 128
    $region21: #{tpu_custom_call.1} parent=1 // pred_fallthru
      _
    // Predicated region
    $region22: #{tpu_custom_call.1} parent=1 // pred_check
      _
    $region23: #{tpu_custom_call.1} parent=1 // pred_check_branch
      %48 = sbr.rel (0) target = $region25
    $region24: #{tpu_custom_call.1} parent=1 // pred_region
      %49 = dma.done [#allocation6], 128
    $region25: #{tpu_custom_call.1} parent=1 // pred_fallthru
      _
    %v50 = vld [vmem:[#allocation2] sm:$0xff]
    %v51 = vld [vmem:[#allocation5] sm:$0xff]
    %v52 = vld [vmem:[#allocation7] sm:$0xff]
    %v53 = vmul.f32 %v50, 2.0
    %v54 = vmul.f32 %v53, %v51
    %vm55 = vcmask 261120
    %v56 = vsel %vm55, %v54, 0.0
    %57 = vadd.xlane.f32.xlu0 %v56
    %v58 = vpop.xlane.xlu0 %57
    %v59 = vsub.f32 0.1, %v58
    %v61 = vsel %vm55, %v53, 0
    %v64 = vsel %vm55, %v52, 0
    %66 = vmatprep.subr.mxu0 0.0
    %67 = vmatpush1.xpose.msra.mxu0 %v64
    %68 = vmatprep.subr.mxu0 0.0
    %69 = vmatpush1.xpose.msra.mxu0 0.0
    %70 = vmatprep.subr.mxu0 0.0
    %71 = vmatpush1.xpose.msra.mxu0 0.0
    %72 = vmatprep.subr.mxu0 0.0
    %73 = vmatpush1.xpose.msra.mxu0 0.0
    %74 = vmatprep.subr.mxu0 0.0
    %75 = vmatpush1.xpose.msra.mxu0 0.0
    %76 = vmatprep.subr.mxu0 0.0
    %77 = vmatpush1.xpose.msra.mxu0 0.0
    %78 = vmatprep.subr.mxu0 0.0
    %79 = vmatpush1.xpose.msra.mxu0 0.0
    %80 = vmatprep.subr.mxu0 0.0
    %81 = vmatpush1.xpose.msra.mxu0 0.0
    %82 = vmatprep.subr.mxu0 0.0
    %83 = vmatpush1.xpose.msra.mxu0 0.0
    %84 = vmatprep.subr.mxu0 0.0
    %85 = vmatpush1.xpose.msra.mxu0 0.0
    %86 = vmatprep.subr.mxu0 0.0
    %87 = vmatpush1.xpose.msra.mxu0 0.0
    %88 = vmatprep.subr.mxu0 0.0
    %89 = vmatpush1.xpose.msra.mxu0 0.0
    %90 = vmatprep.subr.mxu0 0.0
    %91 = vmatpush1.xpose.msra.mxu0 0.0
    %92 = vmatprep.subr.mxu0 0.0
    %93 = vmatpush1.xpose.msra.mxu0 0.0
    %94 = vmatprep.subr.mxu0 0.0
    %95 = vmatpush1.xpose.msra.mxu0 0.0
    %96 = vmatprep.subr.mxu0 0.0
    %97 = vmatpush1.xpose.msra.mxu0 0.0
    %98 = vmatprep.subr.mxu0 0.0
    %99 = vmatpush1.xpose.msra.mxu0 0.0
    %100 = vmatprep.subr.mxu0 0.0
    %101 = vmatpush1.xpose.msra.mxu0 0.0
    %102 = vmatprep.subr.mxu0 0.0
    %103 = vmatpush1.xpose.msra.mxu0 0.0
    %104 = vmatprep.subr.mxu0 0.0
    %105 = vmatpush1.xpose.msra.mxu0 0.0
    %106 = vmatprep.subr.mxu0 0.0
    %107 = vmatpush1.xpose.msra.mxu0 0.0
    %108 = vmatprep.subr.mxu0 0.0
    %109 = vmatpush1.xpose.msra.mxu0 0.0
    %110 = vmatprep.subr.mxu0 0.0
    %111 = vmatpush1.xpose.msra.mxu0 0.0
    %112 = vmatprep.subr.mxu0 0.0
    %113 = vmatpush1.xpose.msra.mxu0 0.0
    %114 = vmatprep.subr.mxu0 0.0
    %115 = vmatpush1.xpose.msra.mxu0 0.0
    %116 = vmatprep.subr.mxu0 0.0
    %117 = vmatpush1.xpose.msra.mxu0 0.0
    %118 = vmatprep.subr.mxu0 0.0
    %119 = vmatpush1.xpose.msra.mxu0 0.0
    %120 = vmatprep.subr.mxu0 0.0
    %121 = vmatpush1.xpose.msra.mxu0 0.0
    %122 = vmatprep.subr.mxu0 0.0
    %123 = vmatpush1.xpose.msra.mxu0 0.0
    %124 = vmatprep.subr.mxu0 0.0
    %125 = vmatpush1.xpose.msra.mxu0 0.0
    %126 = vmatprep.subr.mxu0 0.0
    %127 = vmatpush1.xpose.msra.mxu0 0.0
    %128 = vmatprep.subr.mxu0 0.0
    %129 = vmatpush1.xpose.msra.mxu0 0.0
    %130 = vmatprep.mubr.f32.mxu0 0.0
    %131 = vmatmul.mubr.f32.gmra.mrb[0].mxu0 %v61
    %v132 = vpop.f32.mrb[0].mxu0
    %v133 = vadd.f32 %v59, %v132
    %v134 = vpop.f32.mrb[0].mxu0
    %135 = vdwg.mxu0
    %v136 = vmax.f32 %v133, 0.0
    %vm137 = vcmask 64512
    %v138 = vsel %vm137, %v136, 0.0
    %139 = vadd.xlane.f32.xlu0 %v138
    %v140 = vpop.xlane.xlu0 %139
    %vm141 = vcmask 7168
    %v142 = vsel %vm141, %v140, 0.0
    %143 = vadd.xlane.f32.xlu0 %v142
    %v144 = vpop.xlane.xlu0 %143
    %v145 = vrot.slane %v144, 4
    %v146 = vadd.f32 %v144, %v145
    %v147 = vrot.slane %v146, 2
    %v148 = vadd.f32 %v146, %v147
    %v149 = vrot.slane %v148, 1
    %v150 = vadd.f32 %v148, %v149
    %s151 = vtos %v150
    %s152 = scalar_lea.smem [#allocation8], 0
    %153 = sst [smem:[%s152]] %s151
    // Predicated region
    $region26: #{tpu_custom_call.1} parent=1 // pred_check
      _
    $region27: #{tpu_custom_call.1} parent=1 // pred_check_branch
      %155 = sbr.rel (0) target = $region29
    $region28: #{tpu_custom_call.1} parent=1 // pred_region
      %s157 = ssub.s32 16, 16
      %158 = vsyncadd [#allocation4], %s157
      %161 = dma.smem_to_hbm [#allocation8], 16, %s3, [#allocation4]
    $region29: #{tpu_custom_call.1} parent=1 // pred_fallthru
      _
    // Predicated region
    $region30: #{tpu_custom_call.1} parent=1 // pred_check
      _
    $region31: #{tpu_custom_call.1} parent=1 // pred_check_branch
      %163 = sbr.rel (0) target = $region33
    $region32: #{tpu_custom_call.1} parent=1 // pred_region
      %164 = dma.done [#allocation4], 16
    $region33: #{tpu_custom_call.1} parent=1 // pred_fallthru
      _
    %165 = sfence
    %166 = vsyncpa [#allocation3], 1
    %167 = vsyncpa [#allocation6], 1
    %168 = vsyncpa [#allocation4], 1

</llo_original>
